<compile_context>
chip_gen: v6e
topology: v6e:2x2x1
jax: 0.10.0
libtpu: 0.0.40
codegen_flags: <defaults>
</compile_context>

<pallas_src>
import functools

import jax
import jax.numpy as jnp
from jax.experimental import pallas as pl
from jax.experimental.pallas import tpu as pltpu

HIDDEN = 24  # fc1/fc2 width from the PyTorch module


def _round_up(n, m):
    return ((n + m - 1) // m) * m


def _slab_layout(state_size, action_size, hidden=HIDDEN):
    """Row offsets of each parameter inside the packed (rows, 128) slab.

    Row offsets stay 8-aligned (f32 sublanes) even though the kernel only
    reads `action_size` rows of w3/b3.
    """
    assert hidden % 8 == 0, "hidden must be a multiple of 8 (f32 sublanes)"
    ap = _round_up(action_size, 8)   # reserved rows for the output layer
    off = {}
    r = 0
    off["w1"] = r; r += hidden       # (hidden, state)  in cols [0, state)
    off["w2"] = r; r += hidden       # (hidden, hidden) in cols [0, hidden)
    off["w3"] = r; r += ap           # (action, hidden) in cols [0, hidden)
    off["b1"] = r; r += hidden       # column 0
    off["b2"] = r; r += hidden       # column 0
    off["b3"] = r; r += ap           # column 0
    rows = _round_up(r, 8)
    return off, rows


def pack_dqn_params(params, state_size, action_size, hidden=HIDDEN):
    """Pack PyTorch-layout params (W: (out,in), b: (out,)) into one f32 slab."""
    w1, b1, w2, b2, w3, b3 = params
    off, rows = _slab_layout(state_size, action_size, hidden)
    slab = jnp.zeros((rows, 128), jnp.float32)
    slab = slab.at[off["w1"]:off["w1"] + hidden, :state_size].set(w1.astype(jnp.float32))
    slab = slab.at[off["w2"]:off["w2"] + hidden, :hidden].set(w2.astype(jnp.float32))
    slab = slab.at[off["w3"]:off["w3"] + action_size, :hidden].set(w3.astype(jnp.float32))
    slab = slab.at[off["b1"]:off["b1"] + hidden, 0].set(b1.astype(jnp.float32))
    slab = slab.at[off["b2"]:off["b2"] + hidden, 0].set(b2.astype(jnp.float32))
    slab = slab.at[off["b3"]:off["b3"] + action_size, 0].set(b3.astype(jnp.float32))
    return slab


def _dqn_kernel(p_ref, xT_ref, oT_ref, *, off, state_size, action_size, hidden):
    # Parameter loads from the resident packed slab (masked sub-tile loads;
    # negligible next to the batch stream).
    w1 = p_ref[off["w1"]:off["w1"] + hidden, 0:state_size]       # (H, S)
    w2 = p_ref[off["w2"]:off["w2"] + hidden, 0:hidden]           # (H, H)
    w3 = p_ref[off["w3"]:off["w3"] + action_size, 0:hidden]      # (A, H)
    b1 = p_ref[off["b1"]:off["b1"] + hidden, 0:1]                # (H, 1)
    b2 = p_ref[off["b2"]:off["b2"] + hidden, 0:1]                # (H, 1)
    b3 = p_ref[off["b3"]:off["b3"] + action_size, 0:1]           # (A, 1)

    xT = xT_ref[...]                                             # (S, BT), batch in lanes

    # fc1 + relu : (H, S) @ (S, BT) -> (H, BT)
    h1 = jnp.maximum(jnp.dot(w1, xT, preferred_element_type=jnp.float32) + b1, 0.0)
    # fc2 + relu : (H, H) @ (H, BT) -> (H, BT)
    h2 = jnp.maximum(jnp.dot(w2, h1, preferred_element_type=jnp.float32) + b2, 0.0)
    # fc3        : (A, H) @ (H, BT) -> (A, BT)   (only the live action rows)
    oT_ref[...] = (
        jnp.dot(w3, h2, preferred_element_type=jnp.float32) + b3
    ).astype(oT_ref.dtype)


def _pick_b_tile(batch, max_b_tile):
    """Lane-dense batch tile: large enough to amortize step overhead, but
    small enough that a big batch still yields >= 2 grid steps (v7x megacore)."""
    bmin = _round_up(max(batch, 1), 128)
    bt = min(max_b_tile, bmin)
    if bt > 128 and pl.cdiv(bmin, bt) < 2:
        bt = _round_up(bt // 2, 128)
    return bt


def dqn_forward(x, packed_params, action_size, *, hidden=HIDDEN, max_b_tile=4096):
    """x: (B, state_size) f32; packed_params: (rows, 128) slab.
    Returns (B, action_size) f32, matching the PyTorch forward."""
    batch, state_size = x.shape
    off, rows = _slab_layout(state_size, action_size, hidden)

    b_tile = _pick_b_tile(batch, max_b_tile)
    grid = pl.cdiv(max(batch, 1), b_tile)
    bpad = grid * b_tile

    # Batch-in-lanes: one small wrapper transpose (no sublane padding of the
    # state dim); padded batch columns are zero and get sliced off below.
    xT = x.astype(jnp.float32).T                                 # (S, B)
    if bpad != batch:
        xT = jnp.pad(xT, ((0, 0), (0, bpad - batch)))            # (S, bpad)

    kernel = functools.partial(
        _dqn_kernel, off=off, state_size=state_size,
        action_size=action_size, hidden=hidden)

    oT = pl.pallas_call(
        kernel,
        out_shape=jax.ShapeDtypeStruct((action_size, bpad), jnp.float32),
        grid=(grid,),
        in_specs=[
            # Param slab: constant block index -> DMA'd once, stays resident.
            pl.BlockSpec((rows, 128), lambda i: (0, 0)),
            # Batch tile, batch in lanes; sublane dim = full state dim.
            pl.BlockSpec((state_size, b_tile), lambda i: (0, i)),
        ],
        # Only the live action rows are streamed back (sublane dim = full dim).
        out_specs=pl.BlockSpec((action_size, b_tile), lambda i: (0, i)),
        compiler_params=pltpu.CompilerParams(
            dimension_semantics=("parallel",),   # lets v7x split tiles across TCs
        ),
    )(packed_params, xT)

    # Drop batch padding and return the PyTorch-style (B, action_size) layout.
    return oT[:, :batch].T


def init_dqn_params(key, state_size, action_size, hidden=HIDDEN):
    """PyTorch-layout params with default U(-1/sqrt(fan_in), +1/sqrt(fan_in)) init."""
    def linear(k, fan_in, fan_out):
        kw, kb = jax.random.split(k)
        bound = 1.0 / (fan_in ** 0.5)
        w = jax.random.uniform(kw, (fan_out, fan_in), jnp.float32, -bound, bound)
        b = jax.random.uniform(kb, (fan_out,), jnp.float32, -bound, bound)
        return w, b

    k1, k2, k3 = jax.random.split(key, 3)
    w1, b1 = linear(k1, state_size, hidden)
    w2, b2 = linear(k2, hidden, hidden)
    w3, b3 = linear(k3, hidden, action_size)
    return (w1, b1, w2, b2, w3, b3)


def dqn_reference(x, params):
    """Pure-JAX reference of the PyTorch forward (for correctness check)."""
    w1, b1, w2, b2, w3, b3 = params
    h1 = jnp.maximum(x @ w1.T + b1, 0.0)
    h2 = jnp.maximum(h1 @ w2.T + b2, 0.0)
    return h2 @ w3.T + b3


if __name__ == "__main__":
    # Flappy-Bird-like DQN: small state / action spaces.
    state_size = 4
    action_size = 2

    key = jax.random.PRNGKey(0)
    k_params, k_x1, k_x2 = jax.random.split(key, 3)
    params = init_dqn_params(k_params, state_size, action_size)
    packed = pack_dqn_params(params, state_size, action_size)

    fwd = jax.jit(dqn_forward, static_argnames=("action_size", "hidden", "max_b_tile"))

    # Case 1: tiny online-inference batch (single 128-lane tile, grid = 1).
    x_small = jax.random.normal(k_x1, (8, state_size), dtype=jnp.float32)
    out_small = jax.block_until_ready(fwd(x_small, packed, action_size=action_size))
    ref_small = dqn_reference(x_small, params)
    assert out_small.shape == (8, action_size)
    assert jnp.allclose(out_small, ref_small, atol=1e-4, rtol=1e-4)

    # Case 2: non-multiple batch exercising padding and a 2-step grid.
    x_big = jax.random.normal(k_x2, (300, state_size), dtype=jnp.float32)
    out_big = jax.block_until_ready(fwd(x_big, packed, action_size=action_size))
    ref_big = dqn_reference(x_big, params)
    assert out_big.shape == (300, action_size)
    assert jnp.allclose(out_big, ref_big, atol=1e-4, rtol=1e-4)

    print("KERNEL_OK")
</pallas_src>

<mosaic_0001>
module attributes {stable_mosaic.version = 11 : i64} {
  func.func @_dqn_kernel(%arg0: i32, %arg1: memref<112x128xf32, #tpu.memory_space<vmem>>, %arg2: memref<4x128xf32, #tpu.memory_space<vmem>>, %arg3: memref<2x128xf32, #tpu.memory_space<vmem>>) attributes {dimension_semantics = [#tpu.dimension_semantics<parallel>], iteration_bounds = array<i64: 1>, scalar_prefetch = 0 : i64, scratch_operands = 0 : i64, tpu.core_type = #tpu.core_type<tc>, window_params = [{pipeline_mode = #tpu.pipeline_mode<synchronous>, transform_indices = @transform_0, window_bounds = array<i64: 112, 128>}, {transform_indices = @transform_1, window_bounds = array<i64: 4, 128>}, {transform_indices = @transform_2, window_bounds = array<i64: 2, 128>}]} {
    %c0 = arith.constant 0 : index
    %c0_0 = arith.constant 0 : index
    %0 = vector.load %arg1[%c0, %c0_0] : memref<112x128xf32, #tpu.memory_space<vmem>>, vector<24x4xf32>
    %c24 = arith.constant 24 : index
    %c0_1 = arith.constant 0 : index
    %1 = vector.load %arg1[%c24, %c0_1] : memref<112x128xf32, #tpu.memory_space<vmem>>, vector<24x24xf32>
    %c48 = arith.constant 48 : index
    %c0_2 = arith.constant 0 : index
    %2 = vector.load %arg1[%c48, %c0_2] : memref<112x128xf32, #tpu.memory_space<vmem>>, vector<2x24xf32>
    %c56 = arith.constant 56 : index
    %c0_3 = arith.constant 0 : index
    %3 = vector.load %arg1[%c56, %c0_3] : memref<112x128xf32, #tpu.memory_space<vmem>>, vector<24x1xf32>
    %c80 = arith.constant 80 : index
    %c0_4 = arith.constant 0 : index
    %4 = vector.load %arg1[%c80, %c0_4] : memref<112x128xf32, #tpu.memory_space<vmem>>, vector<24x1xf32>
    %c104 = arith.constant 104 : index
    %c0_5 = arith.constant 0 : index
    %5 = vector.load %arg1[%c104, %c0_5] : memref<112x128xf32, #tpu.memory_space<vmem>>, vector<2x1xf32>
    %c0_6 = arith.constant 0 : index
    %c0_7 = arith.constant 0 : index
    %6 = vector.load %arg2[%c0_6, %c0_7] : memref<4x128xf32, #tpu.memory_space<vmem>>, vector<4x128xf32>
    %cst = arith.constant dense<0.000000e+00> : vector<24x128xf32>
    %7 = tpu.matmul %0, %6, %cst {dimension_numbers = #tpu.dot_dimension_numbers<[1], [0], [0], [1], [0, 0, 1, 1], [], []>} : vector<24x4xf32>, vector<4x128xf32>, vector<24x128xf32> -> vector<24x128xf32>
    %8 = vector.broadcast %3 : vector<24x1xf32> to vector<24x128xf32>
    %9 = arith.addf %7, %8 : vector<24x128xf32>
    %cst_8 = arith.constant 0.000000e+00 : f32
    %10 = vector.broadcast %cst_8 : f32 to vector<24x128xf32>
    %11 = arith.maximumf %9, %10 : vector<24x128xf32>
    %cst_9 = arith.constant dense<0.000000e+00> : vector<24x128xf32>
    %12 = tpu.matmul %1, %11, %cst_9 {dimension_numbers = #tpu.dot_dimension_numbers<[1], [0], [0], [1], [0, 0, 1, 1], [], []>} : vector<24x24xf32>, vector<24x128xf32>, vector<24x128xf32> -> vector<24x128xf32>
    %13 = vector.broadcast %4 : vector<24x1xf32> to vector<24x128xf32>
    %14 = arith.addf %12, %13 : vector<24x128xf32>
    %cst_10 = arith.constant 0.000000e+00 : f32
    %15 = vector.broadcast %cst_10 : f32 to vector<24x128xf32>
    %16 = arith.maximumf %14, %15 : vector<24x128xf32>
    %cst_11 = arith.constant dense<0.000000e+00> : vector<2x128xf32>
    %17 = tpu.matmul %2, %16, %cst_11 {dimension_numbers = #tpu.dot_dimension_numbers<[1], [0], [0], [1], [0, 0, 1, 1], [], []>} : vector<2x24xf32>, vector<24x128xf32>, vector<2x128xf32> -> vector<2x128xf32>
    %18 = vector.broadcast %5 : vector<2x1xf32> to vector<2x128xf32>
    %19 = arith.addf %17, %18 : vector<2x128xf32>
    %c0_12 = arith.constant 0 : index
    %c0_13 = arith.constant 0 : index
    %20 = vector.load %arg3[%c0_12, %c0_13] : memref<2x128xf32, #tpu.memory_space<vmem>>, vector<2x128xf32>
    tpu.vector_store %arg3[%c0_12, %c0_13], %19 {strides = array<i32>} : memref<2x128xf32, #tpu.memory_space<vmem>>, vector<2x128xf32>,
    return
  }
  func.func @transform_0(%arg0: i32) -> (i32, i32) {
    %c0_i32 = arith.constant 0 : i32
    %c0_i32_0 = arith.constant 0 : i32
    %c0_i32_1 = arith.constant 0 : i32
    return %c0_i32, %c0_i32_0 : i32, i32
  }
  func.func @transform_1(%arg0: i32) -> (i32, i32) {
    %c0_i32 = arith.constant 0 : i32
    %c0_i32_0 = arith.constant 0 : i32
    return %c0_i32, %arg0 : i32, i32
  }
  func.func @transform_2(%arg0: i32) -> (i32, i32) {
    %c0_i32 = arith.constant 0 : i32
    %c0_i32_0 = arith.constant 0 : i32
    return %c0_i32, %arg0 : i32, i32
  }
}

</mosaic_0001>

<llo_original>
// kernel: dqn_forward.1
$region0: #{dqn_forward.1}
  #allocation0 [shape = 'u32[]', space=smem, size = 0x4, offset = 0x4, fixed_abs, tag = 'smem constant byte address 0x4 - core index']
  #allocation1 [shape = 'u32[144,128]{1,0:T(1,128)}', space=vmem, size = 0x12000, scoped, tag = 'internal scratch']
  %s0 = inlined_call_operand.hbm [shape: f32[112,128], index: 0, kind: input, shape index: {}]
  %s1 = inlined_call_operand.vmem [shape: f32[4,128], index: 1, kind: input, shape index: {}]
  %s2 = inlined_call_operand.vmem [shape: f32[2,128], index: 2, kind: output, shape index: {}]
  %s3 = sld [smem:[#allocation0]]
  $region22: #{dqn_forward.1} parent=0
    _
  %s5 = ssub.s32 1, %s3
  %s6 = scalar_select 0, %s5, %s3
  $region1: #{dqn_forward.1} parent=0
    #allocation2 [shape = 'u8[57344]{0}', space=vmem, size = 0xe000, scoped, tag = 'input window, operand 0, single buffered']
    #allocation3 [shape = 's32[1]{0}', space=sflag, size = 0x4, scoped, tag = 'scoped memory for dqn_forward.1']
    %7 = vsyncpa [#allocation3], 0
    // Predicated region
    $region2: #{dqn_forward.1} parent=1 // pred_check
      _
    $region3: #{dqn_forward.1} parent=1 // pred_check_branch
      %9 = sbr.rel (0) target = $region5
    $region4: #{dqn_forward.1} parent=1 // pred_region
      %s11 = ssub.s32 1792, 1792
      %12 = vsyncadd [#allocation3], %s11
      %s13 = sshll.u32 [#allocation2], 4
      %s14 = int_to_ptr.vmem [resolvable:$true] %s13
      %19 = dma.hbm_to_vmem [thread:$0]  %s0, 1792, %s14, [#allocation3], 128, 128, 8
    $region5: #{dqn_forward.1} parent=1 // pred_fallthru
      _
    // Predicated region
    $region6: #{dqn_forward.1} parent=1 // pred_check
      _
    $region7: #{dqn_forward.1} parent=1 // pred_check_branch
      %21 = sbr.rel (0) target = $region9
    $region8: #{dqn_forward.1} parent=1 // pred_region
      _
    $region9: #{dqn_forward.1} parent=1 // pred_fallthru
      _
    // Predicated region
    $region10: #{dqn_forward.1} parent=1 // pred_check
      _
    $region11: #{dqn_forward.1} parent=1 // pred_check_branch
      %23 = sbr.rel (0) target = $region13
    $region12: #{dqn_forward.1} parent=1 // pred_region
      %24 = dma.done [#allocation3], 1792
    $region13: #{dqn_forward.1} parent=1 // pred_fallthru
      _
    %v25 = vld [vmem:[#allocation2] sm:$0xff]
    %v26 = vld [vmem:[#allocation2 + $0x8] sm:$0xff]
    %v27 = vld [vmem:[#allocation2 + $0x10] sm:$0xff]
    %v28 = vld [vmem:[#allocation2 + $0x18] sm:$0xff]
    %v29 = vld [vmem:[#allocation2 + $0x20] sm:$0xff]
    %v30 = vld [vmem:[#allocation2 + $0x28] sm:$0xff]
    %v31 = vld [vmem:[#allocation2 + $0x30] sm:$0x3]
    %v32 = vld [vmem:[#allocation2 + $0x38] sm:$0xff]
    %v33 = vld [vmem:[#allocation2 + $0x40] sm:$0xff]
    %v34 = vld [vmem:[#allocation2 + $0x48] sm:$0xff]
    %v35 = vld [vmem:[#allocation2 + $0x50] sm:$0xff]
    %v36 = vld [vmem:[#allocation2 + $0x58] sm:$0xff]
    %v37 = vld [vmem:[#allocation2 + $0x60] sm:$0xff]
    %v38 = vld [vmem:[#allocation2 + $0x68] sm:$0x3]
    %v39 = vld [vmem:[%s1] sm:$0xf]
    %41 = vset.pattern.permute.xlu0 0
    %42 = vperm.xlu0 %41, %v32
    %v43 = vpop.permute.xlu0 %42
    %46 = vset.pattern.permute.xlu0 0
    %47 = vperm.xlu0 %46, %v33
    %v48 = vpop.permute.xlu0 %47
    %51 = vset.pattern.permute.xlu0 0
    %52 = vperm.xlu0 %51, %v34
    %v53 = vpop.permute.xlu0 %52
    %vm55 = vcmask 31744
    %v57 = vsel %vm55, %v25, 0
    %v60 = vsel %vm55, %v26, 0
    %v63 = vsel %vm55, %v27, 0
    %vm65 = vcmask 1043456
    %v67 = vsel %vm65, %v39, 0
    %69 = vmatprep.subr.mxu0 0.0
    %70 = vmatpush1.msra.mxu0 0.0
    %71 = vmatprep.subr.mxu0 0.0
    %72 = vmatpush1.msra.mxu0 0.0
    %73 = vmatprep.subr.mxu0 0.0
    %74 = vmatpush1.msra.mxu0 0.0
    %75 = vmatprep.subr.mxu0 0.0
    %76 = vmatpush1.msra.mxu0 0.0
    %77 = vmatprep.subr.mxu0 0.0
    %78 = vmatpush1.msra.mxu0 0.0
    %79 = vmatprep.subr.mxu0 0.0
    %80 = vmatpush1.msra.mxu0 0.0
    %81 = vmatprep.subr.mxu0 0.0
    %82 = vmatpush1.msra.mxu0 0.0
    %83 = vmatprep.subr.mxu0 0.0
    %84 = vmatpush1.msra.mxu0 0.0
    %85 = vmatprep.subr.mxu0 0.0
    %86 = vmatpush1.msra.mxu0 0.0
    %87 = vmatprep.subr.mxu0 0.0
    %88 = vmatpush1.msra.mxu0 0.0
    %89 = vmatprep.subr.mxu0 0.0
    %90 = vmatpush1.msra.mxu0 0.0
    %91 = vmatprep.subr.mxu0 0.0
    %92 = vmatpush1.msra.mxu0 0.0
    %93 = vmatprep.subr.mxu0 0.0
    %94 = vmatpush1.msra.mxu0 0.0
    %95 = vmatprep.subr.mxu0 0.0
    %96 = vmatpush1.msra.mxu0 0.0
    %97 = vmatprep.subr.mxu0 0.0
    %98 = vmatpush1.msra.mxu0 0.0
    %99 = vmatprep.subr.mxu0 0.0
    %100 = vmatpush1.msra.mxu0 %v67
    %101 = vmatprep.subr.mxu0 0.0
    %102 = vmatpush2.msra.mxu0 0.0
    %103 = vmatprep.subr.mxu0 0.0
    %104 = vmatpush2.msra.mxu0 0.0
    %105 = vmatprep.subr.mxu0 0.0
    %106 = vmatpush2.msra.mxu0 0.0
    %107 = vmatprep.subr.mxu0 0.0
    %108 = vmatpush2.msra.mxu0 0.0
    %109 = vmatprep.subr.mxu0 0.0
    %110 = vmatpush2.msra.mxu0 0.0
    %111 = vmatprep.subr.mxu0 0.0
    %112 = vmatpush2.msra.mxu0 0.0
    %113 = vmatprep.subr.mxu0 0.0
    %114 = vmatpush2.msra.mxu0 0.0
    %115 = vmatprep.subr.mxu0 0.0
    %116 = vmatpush2.msra.mxu0 0.0
    %117 = vmatprep.subr.mxu0 0.0
    %118 = vmatpush2.msra.mxu0 0.0
    %119 = vmatprep.subr.mxu0 0.0
    %120 = vmatpush2.msra.mxu0 0.0
    %121 = vmatprep.subr.mxu0 0.0
    %122 = vmatpush2.msra.mxu0 0.0
    %123 = vmatprep.subr.mxu0 0.0
    %124 = vmatpush2.msra.mxu0 0.0
    %125 = vmatprep.subr.mxu0 0.0
    %126 = vmatpush2.msra.mxu0 0.0
    %127 = vmatprep.subr.mxu0 0.0
    %128 = vmatpush2.msra.mxu0 0.0
    %129 = vmatprep.subr.mxu0 0.0
    %130 = vmatpush2.msra.mxu0 0.0
    %131 = vmatprep.subr.mxu0 0.0
    %132 = vmatpush2.msra.mxu0 0.0
    %133 = vmatprep.mubr.f32.mxu0 0.0
    %134 = vmatmul.mubr.f32.gmra.mxu0 %v57
    %v135 = vpop.f32.mrf.mxu0
    %v136 = vadd.f32 %v43, %v135
    %v137 = vpop.f32.mrf.mxu0
    %138 = vmatprep.mubr.f32.mxu0 0.0
    %139 = vmatmul.mubr.f32.gmra.mxu0 %v60
    %v140 = vpop.f32.mrf.mxu0
    %v141 = vadd.f32 %v48, %v140
    %v142 = vpop.f32.mrf.mxu0
    %143 = vmatprep.mubr.f32.mxu0 0.0
    %144 = vmatmul.mubr.f32.gmra.mxu0 %v63
    %v145 = vpop.f32.mrf.mxu0
    %v146 = vadd.f32 %v53, %v145
    %v147 = vpop.f32.mrf.mxu0
    %148 = vdwg.mxu0
    %v149 = vmax.f32 %v136, 0.0
    %v150 = vmax.f32 %v141, 0.0
    %v151 = vmax.f32 %v146, 0.0
    %153 = vset.pattern.permute.xlu0 0
    %154 = vperm.xlu0 %153, %v35
    %v155 = vpop.permute.xlu0 %154
    %158 = vset.pattern.permute.xlu0 0
    %159 = vperm.xlu0 %158, %v36
    %v160 = vpop.permute.xlu0 %159
    %163 = vset.pattern.permute.xlu0 0
    %164 = vperm.xlu0 %163, %v37
    %v165 = vpop.permute.xlu0 %164
    %vm167 = vcmask 195584
    %v169 = vsel %vm167, %v28, 0
    %v172 = vsel %vm167, %v29, 0
    %v175 = vsel %vm167, %v30, 0
    %177 = vmatprep.subr.mxu0 0.0
    %178 = vmatpush1.msra.mxu0 0.0
    %179 = vmatprep.subr.mxu0 0.0
    %180 = vmatpush1.msra.mxu0 0.0
    %181 = vmatprep.subr.mxu0 0.0
    %182 = vmatpush1.msra.mxu0 0.0
    %183 = vmatprep.subr.mxu0 0.0
    %184 = vmatpush1.msra.mxu0 0.0
    %185 = vmatprep.subr.mxu0 0.0
    %186 = vmatpush1.msra.mxu0 0.0
    %187 = vmatprep.subr.mxu0 0.0
    %188 = vmatpush1.msra.mxu0 0.0
    %189 = vmatprep.subr.mxu0 0.0
    %190 = vmatpush1.msra.mxu0 0.0
    %191 = vmatprep.subr.mxu0 0.0
    %192 = vmatpush1.msra.mxu0 0.0
    %193 = vmatprep.subr.mxu0 0.0
    %194 = vmatpush1.msra.mxu0 0.0
    %195 = vmatprep.subr.mxu0 0.0
    %196 = vmatpush1.msra.mxu0 0.0
    %197 = vmatprep.subr.mxu0 0.0
    %198 = vmatpush1.msra.mxu0 0.0
    %199 = vmatprep.subr.mxu0 0.0
    %200 = vmatpush1.msra.mxu0 0.0
    %201 = vmatprep.subr.mxu0 0.0
    %202 = vmatpush1.msra.mxu0 0.0
    %203 = vmatprep.subr.mxu0 0.0
    %204 = vmatpush1.msra.mxu0 %v151
    %205 = vmatprep.subr.mxu0 0.0
    %206 = vmatpush1.msra.mxu0 %v150
    %207 = vmatprep.subr.mxu0 0.0
    %208 = vmatpush1.msra.mxu0 %v149
    %209 = vmatprep.subr.mxu0 0.0
    %210 = vmatpush2.msra.mxu0 0.0
    %211 = vmatprep.subr.mxu0 0.0
    %212 = vmatpush2.msra.mxu0 0.0
    %213 = vmatprep.subr.mxu0 0.0
    %214 = vmatpush2.msra.mxu0 0.0
    %215 = vmatprep.subr.mxu0 0.0
    %216 = vmatpush2.msra.mxu0 0.0
    %217 = vmatprep.subr.mxu0 0.0
    %218 = vmatpush2.msra.mxu0 0.0
    %219 = vmatprep.subr.mxu0 0.0
    %220 = vmatpush2.msra.mxu0 0.0
    %221 = vmatprep.subr.mxu0 0.0
    %222 = vmatpush2.msra.mxu0 0.0
    %223 = vmatprep.subr.mxu0 0.0
    %224 = vmatpush2.msra.mxu0 0.0
    %225 = vmatprep.subr.mxu0 0.0
    %226 = vmatpush2.msra.mxu0 0.0
    %227 = vmatprep.subr.mxu0 0.0
    %228 = vmatpush2.msra.mxu0 0.0
    %229 = vmatprep.subr.mxu0 0.0
    %230 = vmatpush2.msra.mxu0 0.0
    %231 = vmatprep.subr.mxu0 0.0
    %232 = vmatpush2.msra.mxu0 0.0
    %233 = vmatprep.subr.mxu0 0.0
    %234 = vmatpush2.msra.mxu0 0.0
    %235 = vmatprep.subr.mxu0 0.0
    %236 = vmatpush2.msra.mxu0 0.0
    %237 = vmatprep.subr.mxu0 0.0
    %238 = vmatpush2.msra.mxu0 0.0
    %239 = vmatprep.subr.mxu0 0.0
    %240 = vmatpush2.msra.mxu0 0.0
    %241 = vmatprep.mubr.f32.mxu0 0.0
    %242 = vmatmul.mubr.f32.gmra.mxu0 %v169
    %v243 = vpop.f32.mrf.mxu0
    %v244 = vadd.f32 %v155, %v243
    %v245 = vpop.f32.mrf.mxu0
    %246 = vmatprep.mubr.f32.mxu0 0.0
    %247 = vmatmul.mubr.f32.gmra.mxu0 %v172
    %v248 = vpop.f32.mrf.mxu0
    %v249 = vadd.f32 %v160, %v248
    %v250 = vpop.f32.mrf.mxu0
    %251 = vmatprep.mubr.f32.mxu0 0.0
    %252 = vmatmul.mubr.f32.gmra.mxu0 %v175
    %v253 = vpop.f32.mrf.mxu0
    %v254 = vadd.f32 %v165, %v253
    %v255 = vpop.f32.mrf.mxu0
    %256 = vdwg.mxu0
    %v257 = vmax.f32 %v244, 0.0
    %v258 = vmax.f32 %v249, 0.0
    %v259 = vmax.f32 %v254, 0.0
    %261 = vset.pattern.permute.xlu0 0
    %262 = vperm.xlu0 %261, %v38
    %v263 = vpop.permute.xlu0 %262
    %v266 = vsel %vm167, %v31, 0
    %268 = vmatprep.subr.mxu0 0.0
    %269 = vmatpush1.msra.mxu0 0.0
    %270 = vmatprep.subr.mxu0 0.0
    %271 = vmatpush1.msra.mxu0 0.0
    %272 = vmatprep.subr.mxu0 0.0
    %273 = vmatpush1.msra.mxu0 0.0
    %274 = vmatprep.subr.mxu0 0.0
    %275 = vmatpush1.msra.mxu0 0.0
    %276 = vmatprep.subr.mxu0 0.0
    %277 = vmatpush1.msra.mxu0 0.0
    %278 = vmatprep.subr.mxu0 0.0
    %279 = vmatpush1.msra.mxu0 0.0
    %280 = vmatprep.subr.mxu0 0.0
    %281 = vmatpush1.msra.mxu0 0.0
    %282 = vmatprep.subr.mxu0 0.0
    %283 = vmatpush1.msra.mxu0 0.0
    %284 = vmatprep.subr.mxu0 0.0
    %285 = vmatpush1.msra.mxu0 0.0
    %286 = vmatprep.subr.mxu0 0.0
    %287 = vmatpush1.msra.mxu0 0.0
    %288 = vmatprep.subr.mxu0 0.0
    %289 = vmatpush1.msra.mxu0 0.0
    %290 = vmatprep.subr.mxu0 0.0
    %291 = vmatpush1.msra.mxu0 0.0
    %292 = vmatprep.subr.mxu0 0.0
    %293 = vmatpush1.msra.mxu0 0.0
    %294 = vmatprep.subr.mxu0 0.0
    %295 = vmatpush1.msra.mxu0 %v259
    %296 = vmatprep.subr.mxu0 0.0
    %297 = vmatpush1.msra.mxu0 %v258
    %298 = vmatprep.subr.mxu0 0.0
    %299 = vmatpush1.msra.mxu0 %v257
    %300 = vmatprep.subr.mxu0 0.0
    %301 = vmatpush2.msra.mxu0 0.0
    %302 = vmatprep.subr.mxu0 0.0
    %303 = vmatpush2.msra.mxu0 0.0
    %304 = vmatprep.subr.mxu0 0.0
    %305 = vmatpush2.msra.mxu0 0.0
    %306 = vmatprep.subr.mxu0 0.0
    %307 = vmatpush2.msra.mxu0 0.0
    %308 = vmatprep.subr.mxu0 0.0
    %309 = vmatpush2.msra.mxu0 0.0
    %310 = vmatprep.subr.mxu0 0.0
    %311 = vmatpush2.msra.mxu0 0.0
    %312 = vmatprep.subr.mxu0 0.0
    %313 = vmatpush2.msra.mxu0 0.0
    %314 = vmatprep.subr.mxu0 0.0
    %315 = vmatpush2.msra.mxu0 0.0
    %316 = vmatprep.subr.mxu0 0.0
    %317 = vmatpush2.msra.mxu0 0.0
    %318 = vmatprep.subr.mxu0 0.0
    %319 = vmatpush2.msra.mxu0 0.0
    %320 = vmatprep.subr.mxu0 0.0
    %321 = vmatpush2.msra.mxu0 0.0
    %322 = vmatprep.subr.mxu0 0.0
    %323 = vmatpush2.msra.mxu0 0.0
    %324 = vmatprep.subr.mxu0 0.0
    %325 = vmatpush2.msra.mxu0 0.0
    %326 = vmatprep.subr.mxu0 0.0
    %327 = vmatpush2.msra.mxu0 0.0
    %328 = vmatprep.subr.mxu0 0.0
    %329 = vmatpush2.msra.mxu0 0.0
    %330 = vmatprep.subr.mxu0 0.0
    %331 = vmatpush2.msra.mxu0 0.0
    %332 = vmatprep.mubr.f32.mxu0 0.0
    %333 = vmatmul.mubr.f32.gmra.mxu0 %v266
    %v334 = vpop.f32.mrf.mxu0
    %v335 = vadd.f32 %v263, %v334
    %v336 = vpop.f32.mrf.mxu0
    %337 = vdwg.mxu0
    %338 = vst [vmem:[%s2] sm:$0x3] %v335
    // Predicated region
    $region14: #{dqn_forward.1} parent=1 // pred_check
      _
    $region15: #{dqn_forward.1} parent=1 // pred_check_branch
      %340 = sbr.rel (0) target = $region17
    $region16: #{dqn_forward.1} parent=1 // pred_region
      _
    $region17: #{dqn_forward.1} parent=1 // pred_fallthru
      _
    // Predicated region
    $region18: #{dqn_forward.1} parent=1 // pred_check
      _
    $region19: #{dqn_forward.1} parent=1 // pred_check_branch
      %342 = sbr.rel (0) target = $region21
    $region20: #{dqn_forward.1} parent=1 // pred_region
      _
    $region21: #{dqn_forward.1} parent=1 // pred_fallthru
      _
    %343 = vsyncpa [#allocation3], 1

</llo_original>
